<compile_context>
chip_gen: v6e
topology: v6e:2x2x1
jax: 0.10.0
libtpu: 0.0.40
codegen_flags: <defaults>
</compile_context>

<pallas_src>
import math

import jax
import jax.numpy as jnp
from jax.experimental import pallas as pl
from jax.experimental.pallas import tpu as pltpu


def _round_up(n: int, m: int) -> int:
    return ((n + m - 1) // m) * m


def _fc_block_kernel(x_ref, keep_ref, w1_ref, b1_ref, w2_ref, b2_ref, o_ref):
    """One batch tile: fc1 (bf16 MXU) + bias + ReLU + dropout mask + fc2 (bf16 MXU)."""
    x = x_ref[...]                                               # [TB, Din]  f32

    # fc1: bf16 operands, f32 accumulate on the MXU.
    h = jnp.dot(x.astype(jnp.bfloat16), w1_ref[...],
                preferred_element_type=jnp.float32)
    h = jnp.maximum(h + b1_ref[...], 0.0)                        # bias + ReLU (f32)

    # Dropout: keep mask is {0,1}; the 1/(1-p) scale is pre-folded into w2.
    h = h * keep_ref[...].astype(jnp.float32)

    # fc2: bf16 operands, f32 accumulate; w2 already carries the dropout scale.
    y = jnp.dot(h.astype(jnp.bfloat16), w2_ref[...],
                preferred_element_type=jnp.float32) + b2_ref[...]
    o_ref[...] = y.astype(o_ref.dtype)


def fully_connected_linear_block(x, w1, b1, w2, b2, *, p=0.5, dropout_key=None,
                                 block_batch=512):
    """Forward pass of FullyConnectedLinearBlock.

    x : [B, D_in] float32
    w1: [D_in, D_in], b1: [D_in]   (y1 = x @ w1 + b1, i.e. w1 = W1_pytorch.T)
    w2: [D_in, D_out], b2: [D_out]
    p : dropout probability (F.dropout default training=True semantics).
    """
    B, D_in = x.shape
    D_out = w2.shape[1]

    Din_p = _round_up(D_in, 128)        # lane-dense feature dims
    Dout_p = _round_up(D_out, 128)
    TB = min(block_batch, _round_up(B, 8))
    B_p = _round_up(B, TB)
    grid = (B_p // TB,)

    # Dropout keep mask ({0,1}), generated host-side; scale folded into w2.
    if p <= 0.0:
        keep = jnp.ones((B_p, Din_p), jnp.bfloat16)
        scale = 1.0
    elif p >= 1.0:
        keep = jnp.zeros((B_p, Din_p), jnp.bfloat16)
        scale = 1.0
    else:
        if dropout_key is None:
            dropout_key = jax.random.PRNGKey(0)
        keep = jax.random.bernoulli(dropout_key, 1.0 - p,
                                    (B_p, Din_p)).astype(jnp.bfloat16)
        scale = 1.0 / (1.0 - p)

    # Zero-pad to 128-multiple feature dims and tile-aligned batch.
    f32, bf16 = jnp.float32, jnp.bfloat16
    xp = jnp.zeros((B_p, Din_p), f32).at[:B, :D_in].set(x.astype(f32))
    w1p = jnp.zeros((Din_p, Din_p), bf16).at[:D_in, :D_in].set(w1.astype(bf16))
    b1p = jnp.zeros((1, Din_p), f32).at[0, :D_in].set(b1.reshape(-1).astype(f32))
    w2p = jnp.zeros((Din_p, Dout_p), bf16).at[:D_in, :D_out].set(
        (w2 * scale).astype(bf16))
    b2p = jnp.zeros((1, Dout_p), f32).at[0, :D_out].set(b2.reshape(-1).astype(f32))

    cost = pl.CostEstimate(
        flops=2 * B_p * Din_p * (Din_p + Dout_p),
        transcendentals=0,
        bytes_accessed=(4 * B_p * Din_p          # x (f32)
                        + 2 * B_p * Din_p        # keep mask (bf16)
                        + 2 * Din_p * Din_p      # w1 (bf16)
                        + 2 * Din_p * Dout_p     # w2 (bf16)
                        + 4 * (Din_p + Dout_p)   # biases (f32)
                        + 4 * B_p * Dout_p),     # y (f32)
    )

    yp = pl.pallas_call(
        _fc_block_kernel,
        out_shape=jax.ShapeDtypeStruct((B_p, Dout_p), jnp.float32),
        grid=grid,
        in_specs=[
            pl.BlockSpec((TB, Din_p), lambda i: (i, 0)),       # x tile (pipelined)
            pl.BlockSpec((TB, Din_p), lambda i: (i, 0)),       # keep-mask tile
            pl.BlockSpec((Din_p, Din_p), lambda i: (0, 0)),    # w1 (VMEM-resident)
            pl.BlockSpec((1, Din_p), lambda i: (0, 0)),        # b1
            pl.BlockSpec((Din_p, Dout_p), lambda i: (0, 0)),   # w2 (VMEM-resident)
            pl.BlockSpec((1, Dout_p), lambda i: (0, 0)),       # b2
        ],
        out_specs=pl.BlockSpec((TB, Dout_p), lambda i: (i, 0)),
        compiler_params=pltpu.CompilerParams(
            dimension_semantics=("parallel",)),
        cost_estimate=cost,
    )(xp, keep, w1p, b1p, w2p, b2p)

    return yp[:B, :D_out]


if __name__ == "__main__":
    batch, input_dim, output_dim = 8, 32, 16
    p = 0.5

    key = jax.random.PRNGKey(0)
    kx, kw1, kb1, kw2, kb2, kdrop = jax.random.split(key, 6)

    # PyTorch-style uniform(-1/sqrt(fan_in), 1/sqrt(fan_in)) init (deterministic).
    bound = 1.0 / math.sqrt(input_dim)
    w1 = jax.random.uniform(kw1, (input_dim, input_dim), jnp.float32, -bound, bound)
    b1 = jax.random.uniform(kb1, (input_dim,), jnp.float32, -bound, bound)
    w2 = jax.random.uniform(kw2, (input_dim, output_dim), jnp.float32, -bound, bound)
    b2 = jax.random.uniform(kb2, (output_dim,), jnp.float32, -bound, bound)

    x = jax.random.normal(kx, (batch, input_dim), jnp.float32)

    out = fully_connected_linear_block(x, w1, b1, w2, b2, p=p, dropout_key=kdrop)
    out = jax.block_until_ready(out)
    assert out.shape == (batch, output_dim) and out.dtype == jnp.float32
    print("KERNEL_OK")
</pallas_src>

<mosaic_0001>
module attributes {stable_mosaic.version = 11 : i64} {
  func.func @_fc_block_kernel(%arg0: i32, %arg1: memref<8x128xf32, #tpu.memory_space<vmem>>, %arg2: memref<8x128xbf16, #tpu.memory_space<vmem>>, %arg3: memref<128x128xbf16, #tpu.memory_space<vmem>>, %arg4: memref<1x128xf32, #tpu.memory_space<vmem>>, %arg5: memref<128x128xbf16, #tpu.memory_space<vmem>>, %arg6: memref<1x128xf32, #tpu.memory_space<vmem>>, %arg7: memref<8x128xf32, #tpu.memory_space<vmem>>) attributes {dimension_semantics = [#tpu.dimension_semantics<parallel>], iteration_bounds = array<i64: 1>, scalar_prefetch = 0 : i64, scratch_operands = 0 : i64, tpu.core_type = #tpu.core_type<tc>, window_params = [{transform_indices = @transform_0, window_bounds = array<i64: 8, 128>}, {transform_indices = @transform_1, window_bounds = array<i64: 8, 128>}, {pipeline_mode = #tpu.pipeline_mode<synchronous>, transform_indices = @transform_2, window_bounds = array<i64: 128, 128>}, {pipeline_mode = #tpu.pipeline_mode<synchronous>, transform_indices = @transform_3, window_bounds = array<i64: 1, 128>}, {pipeline_mode = #tpu.pipeline_mode<synchronous>, transform_indices = @transform_4, window_bounds = array<i64: 128, 128>}, {pipeline_mode = #tpu.pipeline_mode<synchronous>, transform_indices = @transform_5, window_bounds = array<i64: 1, 128>}, {transform_indices = @transform_6, window_bounds = array<i64: 8, 128>}]} {
    %c0 = arith.constant 0 : index
    %c0_0 = arith.constant 0 : index
    %0 = vector.load %arg1[%c0, %c0_0] : memref<8x128xf32, #tpu.memory_space<vmem>>, vector<8x128xf32>
    %1 = arith.truncf %0 : vector<8x128xf32> to vector<8x128xbf16>
    %c0_1 = arith.constant 0 : index
    %c0_2 = arith.constant 0 : index
    %2 = vector.load %arg3[%c0_1, %c0_2] : memref<128x128xbf16, #tpu.memory_space<vmem>>, vector<128x128xbf16>
    %cst = arith.constant dense<0.000000e+00> : vector<8x128xf32>
    %3 = tpu.matmul %1, %2, %cst {dimension_numbers = #tpu.dot_dimension_numbers<[1], [0], [0], [1], [0, 0, 1, 1], [], []>} : vector<8x128xbf16>, vector<128x128xbf16>, vector<8x128xf32> -> vector<8x128xf32>
    %c0_3 = arith.constant 0 : index
    %c0_4 = arith.constant 0 : index
    %4 = vector.load %arg4[%c0_3, %c0_4] : memref<1x128xf32, #tpu.memory_space<vmem>>, vector<1x128xf32>
    %5 = vector.broadcast %4 : vector<1x128xf32> to vector<8x128xf32>
    %6 = arith.addf %3, %5 : vector<8x128xf32>
    %cst_5 = arith.constant 0.000000e+00 : f32
    %7 = vector.broadcast %cst_5 : f32 to vector<8x128xf32>
    %8 = arith.maximumf %6, %7 : vector<8x128xf32>
    %c0_6 = arith.constant 0 : index
    %c0_7 = arith.constant 0 : index
    %9 = vector.load %arg2[%c0_6, %c0_7] : memref<8x128xbf16, #tpu.memory_space<vmem>>, vector<8x128xbf16>
    %10 = arith.extf %9 : vector<8x128xbf16> to vector<8x128xf32>
    %11 = arith.mulf %8, %10 : vector<8x128xf32>
    %12 = arith.truncf %11 : vector<8x128xf32> to vector<8x128xbf16>
    %c0_8 = arith.constant 0 : index
    %c0_9 = arith.constant 0 : index
    %13 = vector.load %arg5[%c0_8, %c0_9] : memref<128x128xbf16, #tpu.memory_space<vmem>>, vector<128x128xbf16>
    %cst_10 = arith.constant dense<0.000000e+00> : vector<8x128xf32>
    %14 = tpu.matmul %12, %13, %cst_10 {dimension_numbers = #tpu.dot_dimension_numbers<[1], [0], [0], [1], [0, 0, 1, 1], [], []>} : vector<8x128xbf16>, vector<128x128xbf16>, vector<8x128xf32> -> vector<8x128xf32>
    %c0_11 = arith.constant 0 : index
    %c0_12 = arith.constant 0 : index
    %15 = vector.load %arg6[%c0_11, %c0_12] : memref<1x128xf32, #tpu.memory_space<vmem>>, vector<1x128xf32>
    %16 = vector.broadcast %15 : vector<1x128xf32> to vector<8x128xf32>
    %17 = arith.addf %14, %16 : vector<8x128xf32>
    %c0_13 = arith.constant 0 : index
    %c0_14 = arith.constant 0 : index
    %18 = vector.load %arg7[%c0_13, %c0_14] : memref<8x128xf32, #tpu.memory_space<vmem>>, vector<8x128xf32>
    tpu.vector_store %arg7[%c0_13, %c0_14], %17 {strides = array<i32>} : memref<8x128xf32, #tpu.memory_space<vmem>>, vector<8x128xf32>,
    return
  }
  func.func @transform_0(%arg0: i32) -> (i32, i32) {
    %c0_i32 = arith.constant 0 : i32
    %c0_i32_0 = arith.constant 0 : i32
    return %arg0, %c0_i32 : i32, i32
  }
  func.func @transform_1(%arg0: i32) -> (i32, i32) {
    %c0_i32 = arith.constant 0 : i32
    %c0_i32_0 = arith.constant 0 : i32
    return %arg0, %c0_i32 : i32, i32
  }
  func.func @transform_2(%arg0: i32) -> (i32, i32) {
    %c0_i32 = arith.constant 0 : i32
    %c0_i32_0 = arith.constant 0 : i32
    %c0_i32_1 = arith.constant 0 : i32
    return %c0_i32, %c0_i32_0 : i32, i32
  }
  func.func @transform_3(%arg0: i32) -> (i32, i32) {
    %c0_i32 = arith.constant 0 : i32
    %c0_i32_0 = arith.constant 0 : i32
    %c0_i32_1 = arith.constant 0 : i32
    return %c0_i32, %c0_i32_0 : i32, i32
  }
  func.func @transform_4(%arg0: i32) -> (i32, i32) {
    %c0_i32 = arith.constant 0 : i32
    %c0_i32_0 = arith.constant 0 : i32
    %c0_i32_1 = arith.constant 0 : i32
    return %c0_i32, %c0_i32_0 : i32, i32
  }
  func.func @transform_5(%arg0: i32) -> (i32, i32) {
    %c0_i32 = arith.constant 0 : i32
    %c0_i32_0 = arith.constant 0 : i32
    %c0_i32_1 = arith.constant 0 : i32
    return %c0_i32, %c0_i32_0 : i32, i32
  }
  func.func @transform_6(%arg0: i32) -> (i32, i32) {
    %c0_i32 = arith.constant 0 : i32
    %c0_i32_0 = arith.constant 0 : i32
    return %arg0, %c0_i32 : i32, i32
  }
}

</mosaic_0001>

<llo_original>
// kernel: tpu_custom_call.1
$region0: #{tpu_custom_call.1}
  #allocation0 [shape = 'u32[]', space=smem, size = 0x4, offset = 0x4, fixed_abs, tag = 'smem constant byte address 0x4 - core index']
  #allocation1 [shape = 'u32[144,128]{1,0:T(1,128)}', space=vmem, size = 0x12000, scoped, tag = 'internal scratch']
  %s0 = inlined_call_operand.hbm [shape: f32[8,128], index: 0, kind: input, shape index: {}]
  %s1 = inlined_call_operand.hbm [shape: bf16[8,128], index: 1, kind: input, shape index: {}]
  %s2 = inlined_call_operand.hbm [shape: bf16[128,128], index: 2, kind: input, shape index: {}]
  %s3 = inlined_call_operand.vmem [shape: f32[1,128], index: 3, kind: input, shape index: {}]
  %s4 = inlined_call_operand.hbm [shape: bf16[128,128], index: 4, kind: input, shape index: {}]
  %s5 = inlined_call_operand.vmem [shape: f32[1,128], index: 5, kind: input, shape index: {}]
  %s6 = inlined_call_operand.hbm [shape: f32[8,128], index: 6, kind: output, shape index: {}]
  %s7 = sld [smem:[#allocation0]]
  $region50: #{tpu_custom_call.1} parent=0
    _
  %s9 = ssub.s32 1, %s7
  %s10 = scalar_select 0, %s9, %s7
  $region1: #{tpu_custom_call.1} parent=0
    #allocation2 [shape = 'u8[4096]{0}', space=vmem, size = 0x1000, scoped, tag = 'input window, operand 0, single buffered']
    #allocation3 [shape = 's32[1]{0}', space=sflag, size = 0x4, scoped, tag = 'scoped memory for tpu_custom_call.1']
    #allocation4 [shape = 's32[1]{0}', space=sflag, size = 0x4, scoped, tag = 'scoped memory for tpu_custom_call.1']
    #allocation5 [shape = 'u8[2048]{0}', space=vmem, size = 0x800, scoped, tag = 'input window, operand 1, single buffered']
    #allocation6 [shape = 's32[1]{0}', space=sflag, size = 0x4, scoped, tag = 'scoped memory for tpu_custom_call.1']
    #allocation7 [shape = 'u8[32768]{0}', space=vmem, size = 0x8000, scoped, tag = 'input window, operand 2, single buffered']
    #allocation8 [shape = 'u8[32768]{0}', space=vmem, size = 0x8000, scoped, tag = 'input window, operand 4, single buffered']
    #allocation9 [shape = 's32[1]{0}', space=sflag, size = 0x4, scoped, tag = 'scoped memory for tpu_custom_call.1']
    #allocation10 [shape = 'u8[4096]{0}', space=vmem, size = 0x1000, scoped, tag = 'output window, operand 0, single buffered']
    %11 = vsyncpa [#allocation3], 0
    %12 = vsyncpa [#allocation6], 0
    %13 = vsyncpa [#allocation9], 0
    %14 = vsyncpa [#allocation4], 0
    // Predicated region
    $region2: #{tpu_custom_call.1} parent=1 // pred_check
      _
    $region3: #{tpu_custom_call.1} parent=1 // pred_check_branch
      %16 = sbr.rel (0) target = $region5
    $region4: #{tpu_custom_call.1} parent=1 // pred_region
      %s18 = ssub.s32 128, 128
      %19 = vsyncadd [#allocation3], %s18
      %s21 = sshll.u32 [#allocation2], 4
      %s22 = int_to_ptr.vmem [resolvable:$true] %s21
      %24 = dma.hbm_to_vmem [thread:$0]  %s0, 128, %s22, [#allocation3]
    $region5: #{tpu_custom_call.1} parent=1 // pred_fallthru
      _
    // Predicated region
    $region6: #{tpu_custom_call.1} parent=1 // pred_check
      _
    $region7: #{tpu_custom_call.1} parent=1 // pred_check_branch
      %26 = sbr.rel (0) target = $region9
    $region8: #{tpu_custom_call.1} parent=1 // pred_region
      %s28 = ssub.s32 64, 64
      %29 = vsyncadd [#allocation6], %s28
      %s31 = sshll.u32 [#allocation5], 4
      %s32 = int_to_ptr.vmem [resolvable:$true] %s31
      %34 = dma.hbm_to_vmem [thread:$0]  %s1, 64, %s32, [#allocation6]
    $region9: #{tpu_custom_call.1} parent=1 // pred_fallthru
      _
    // Predicated region
    $region10: #{tpu_custom_call.1} parent=1 // pred_check
      _
    $region11: #{tpu_custom_call.1} parent=1 // pred_check_branch
      %36 = sbr.rel (0) target = $region13
    $region12: #{tpu_custom_call.1} parent=1 // pred_region
      %s38 = ssub.s32 1024, 1024
      %39 = vsyncadd [#allocation6], %s38
      %s40 = sshll.u32 [#allocation7], 4
      %s41 = int_to_ptr.vmem [resolvable:$true] %s40
      %46 = dma.hbm_to_vmem [thread:$0]  %s2, 1024, %s41, [#allocation6], 64, 64, 4
    $region13: #{tpu_custom_call.1} parent=1 // pred_fallthru
      _
    // Predicated region
    $region14: #{tpu_custom_call.1} parent=1 // pred_check
      _
    $region15: #{tpu_custom_call.1} parent=1 // pred_check_branch
      %48 = sbr.rel (0) target = $region17
    $region16: #{tpu_custom_call.1} parent=1 // pred_region
      _
    $region17: #{tpu_custom_call.1} parent=1 // pred_fallthru
      _
    // Predicated region
    $region18: #{tpu_custom_call.1} parent=1 // pred_check
      _
    $region19: #{tpu_custom_call.1} parent=1 // pred_check_branch
      %50 = sbr.rel (0) target = $region21
    $region20: #{tpu_custom_call.1} parent=1 // pred_region
      %s52 = ssub.s32 1024, 1024
      %53 = vsyncadd [#allocation9], %s52
      %s54 = sshll.u32 [#allocation8], 4
      %s55 = int_to_ptr.vmem [resolvable:$true] %s54
      %60 = dma.hbm_to_vmem [thread:$0]  %s4, 1024, %s55, [#allocation9], 64, 64, 4
    $region21: #{tpu_custom_call.1} parent=1 // pred_fallthru
      _
    // Predicated region
    $region22: #{tpu_custom_call.1} parent=1 // pred_check
      _
    $region23: #{tpu_custom_call.1} parent=1 // pred_check_branch
      %62 = sbr.rel (0) target = $region25
    $region24: #{tpu_custom_call.1} parent=1 // pred_region
      _
    $region25: #{tpu_custom_call.1} parent=1 // pred_fallthru
      _
    // Predicated region
    $region26: #{tpu_custom_call.1} parent=1 // pred_check
      _
    $region27: #{tpu_custom_call.1} parent=1 // pred_check_branch
      %64 = sbr.rel (0) target = $region29
    $region28: #{tpu_custom_call.1} parent=1 // pred_region
      %65 = dma.done [#allocation3], 128
    $region29: #{tpu_custom_call.1} parent=1 // pred_fallthru
      _
    // Predicated region
    $region30: #{tpu_custom_call.1} parent=1 // pred_check
      _
    $region31: #{tpu_custom_call.1} parent=1 // pred_check_branch
      %67 = sbr.rel (0) target = $region33
    $region32: #{tpu_custom_call.1} parent=1 // pred_region
      %68 = dma.done [#allocation6], 64
    $region33: #{tpu_custom_call.1} parent=1 // pred_fallthru
      _
    // Predicated region
    $region34: #{tpu_custom_call.1} parent=1 // pred_check
      _
    $region35: #{tpu_custom_call.1} parent=1 // pred_check_branch
      %70 = sbr.rel (0) target = $region37
    $region36: #{tpu_custom_call.1} parent=1 // pred_region
      %71 = dma.done [#allocation6], 1024
    $region37: #{tpu_custom_call.1} parent=1 // pred_fallthru
      _
    // Predicated region
    $region38: #{tpu_custom_call.1} parent=1 // pred_check
      _
    $region39: #{tpu_custom_call.1} parent=1 // pred_check_branch
      %73 = sbr.rel (0) target = $region41
    $region40: #{tpu_custom_call.1} parent=1 // pred_region
      %74 = dma.done [#allocation9], 1024
    $region41: #{tpu_custom_call.1} parent=1 // pred_fallthru
      _
    %v76 = vld [vmem:[#allocation2] sm:$0xff]
    %v77 = vpack.c.bf16 %v76, %v76
    %v78 = vld [vmem:[#allocation7] sm:$0xf]
    %v79 = vld [vmem:[#allocation7 + $0x4] sm:$0xf]
    %v80 = vld [vmem:[#allocation7 + $0x8] sm:$0xf]
    %v81 = vld [vmem:[#allocation7 + $0xc] sm:$0xf]
    %v82 = vld [vmem:[#allocation7 + $0x10] sm:$0xf]
    %v83 = vld [vmem:[#allocation7 + $0x14] sm:$0xf]
    %v84 = vld [vmem:[#allocation7 + $0x18] sm:$0xf]
    %v85 = vld [vmem:[#allocation7 + $0x1c] sm:$0xf]
    %v86 = vld [vmem:[#allocation7 + $0x20] sm:$0xf]
    %v87 = vld [vmem:[#allocation7 + $0x24] sm:$0xf]
    %v88 = vld [vmem:[#allocation7 + $0x28] sm:$0xf]
    %v89 = vld [vmem:[#allocation7 + $0x2c] sm:$0xf]
    %v90 = vld [vmem:[#allocation7 + $0x30] sm:$0xf]
    %v91 = vld [vmem:[#allocation7 + $0x34] sm:$0xf]
    %v92 = vld [vmem:[#allocation7 + $0x38] sm:$0xf]
    %v93 = vld [vmem:[#allocation7 + $0x3c] sm:$0xf]
    %v94 = vld [vmem:[%s3] sm:$0x1]
    %v96 = vlaneseq
    %v97 = vshrl.u32 %v96, 7
    %v98 = vsub.s32 0, %v97
    %v99 = vrot.slane %v94, %v98
    %v117 = vunpack.c.l.b16 %v78
    %v118 = vunpack.c.l.b16 %v79
    %v119 = vunpack.c.l.b16 %v80
    %v120 = vunpack.c.l.b16 %v81
    %v121 = vunpack.c.l.b16 %v82
    %v122 = vunpack.c.l.b16 %v83
    %v123 = vunpack.c.l.b16 %v84
    %v124 = vunpack.c.l.b16 %v85
    %v125 = vunpack.c.l.b16 %v86
    %v126 = vunpack.c.l.b16 %v87
    %v127 = vunpack.c.l.b16 %v88
    %v128 = vunpack.c.l.b16 %v89
    %v129 = vunpack.c.l.b16 %v90
    %v130 = vunpack.c.l.b16 %v91
    %v131 = vunpack.c.l.b16 %v92
    %v132 = vunpack.c.l.b16 %v93
    %v133 = vpack.c.b16 %v118, %v117
    %v134 = vpack.c.b16 %v120, %v119
    %v135 = vpack.c.b16 %v122, %v121
    %v136 = vpack.c.b16 %v124, %v123
    %v137 = vpack.c.b16 %v126, %v125
    %v138 = vpack.c.b16 %v128, %v127
    %v139 = vpack.c.b16 %v130, %v129
    %v140 = vpack.c.b16 %v132, %v131
    %149 = vmatprep.subr.bf16.mxu0 0
    %150 = vmatpush1.bf16.msra.mxu0 %v140
    %151 = vmatprep.subr.bf16.mxu0 0
    %152 = vmatpush1.bf16.msra.mxu0 %v139
    %153 = vmatprep.subr.bf16.mxu0 0
    %154 = vmatpush1.bf16.msra.mxu0 %v138
    %155 = vmatprep.subr.bf16.mxu0 0
    %156 = vmatpush1.bf16.msra.mxu0 %v137
    %157 = vmatprep.subr.bf16.mxu0 0
    %158 = vmatpush1.bf16.msra.mxu0 %v136
    %159 = vmatprep.subr.bf16.mxu0 0
    %160 = vmatpush1.bf16.msra.mxu0 %v135
    %161 = vmatprep.subr.bf16.mxu0 0
    %162 = vmatpush1.bf16.msra.mxu0 %v134
    %163 = vmatprep.subr.bf16.mxu0 0
    %164 = vmatpush1.bf16.msra.mxu0 %v133
    %165 = vmatprep.subr.bf16.mxu0 0
    %166 = vmatpush2.bf16.msra.mxu0 0
    %167 = vmatprep.subr.bf16.mxu0 0
    %168 = vmatpush2.bf16.msra.mxu0 0
    %169 = vmatprep.subr.bf16.mxu0 0
    %170 = vmatpush2.bf16.msra.mxu0 0
    %171 = vmatprep.subr.bf16.mxu0 0
    %172 = vmatpush2.bf16.msra.mxu0 0
    %173 = vmatprep.subr.bf16.mxu0 0
    %174 = vmatpush2.bf16.msra.mxu0 0
    %175 = vmatprep.subr.bf16.mxu0 0
    %176 = vmatpush2.bf16.msra.mxu0 0
    %177 = vmatprep.subr.bf16.mxu0 0
    %178 = vmatpush2.bf16.msra.mxu0 0
    %179 = vmatprep.subr.bf16.mxu0 0
    %180 = vmatpush2.bf16.msra.mxu0 0
    %181 = vmatprep.mubr.bf16.mxu0 0
    %182 = vmatmul.mubr.bf16.gmra.mxu0 %v77
    %v183 = vpop.f32.mrf.mxu0
    %v184 = vadd.f32 %v99, %v183
    %v185 = vpop.f32.mrf.mxu0
    %v186 = vpop.f32.mrf.mxu0
    %v187 = vpop.f32.mrf.mxu0
    %188 = vdwg.mxu0
    %v189 = vmax.f32 %v184, 0.0
    %v190 = vld [vmem:[#allocation5] sm:$0xf]
    %v191 = vunpack.c.l.bf16 %v190
    %v192 = vmul.f32 %v189, %v191
    %v193 = vpack.c.bf16 %v192, %v192
    %v194 = vld [vmem:[#allocation8] sm:$0xf]
    %v195 = vld [vmem:[#allocation8 + $0x4] sm:$0xf]
    %v196 = vld [vmem:[#allocation8 + $0x8] sm:$0xf]
    %v197 = vld [vmem:[#allocation8 + $0xc] sm:$0xf]
    %v198 = vld [vmem:[#allocation8 + $0x10] sm:$0xf]
    %v199 = vld [vmem:[#allocation8 + $0x14] sm:$0xf]
    %v200 = vld [vmem:[#allocation8 + $0x18] sm:$0xf]
    %v201 = vld [vmem:[#allocation8 + $0x1c] sm:$0xf]
    %v202 = vld [vmem:[#allocation8 + $0x20] sm:$0xf]
    %v203 = vld [vmem:[#allocation8 + $0x24] sm:$0xf]
    %v204 = vld [vmem:[#allocation8 + $0x28] sm:$0xf]
    %v205 = vld [vmem:[#allocation8 + $0x2c] sm:$0xf]
    %v206 = vld [vmem:[#allocation8 + $0x30] sm:$0xf]
    %v207 = vld [vmem:[#allocation8 + $0x34] sm:$0xf]
    %v208 = vld [vmem:[#allocation8 + $0x38] sm:$0xf]
    %v209 = vld [vmem:[#allocation8 + $0x3c] sm:$0xf]
    %v210 = vld [vmem:[%s5] sm:$0x1]
    %v212 = vlaneseq
    %v213 = vshrl.u32 %v212, 7
    %v214 = vsub.s32 0, %v213
    %v215 = vrot.slane %v210, %v214
    %v233 = vunpack.c.l.b16 %v194
    %v234 = vunpack.c.l.b16 %v195
    %v235 = vunpack.c.l.b16 %v196
    %v236 = vunpack.c.l.b16 %v197
    %v237 = vunpack.c.l.b16 %v198
    %v238 = vunpack.c.l.b16 %v199
    %v239 = vunpack.c.l.b16 %v200
    %v240 = vunpack.c.l.b16 %v201
    %v241 = vunpack.c.l.b16 %v202
    %v242 = vunpack.c.l.b16 %v203
    %v243 = vunpack.c.l.b16 %v204
    %v244 = vunpack.c.l.b16 %v205
    %v245 = vunpack.c.l.b16 %v206
    %v246 = vunpack.c.l.b16 %v207
    %v247 = vunpack.c.l.b16 %v208
    %v248 = vunpack.c.l.b16 %v209
    %v249 = vpack.c.b16 %v234, %v233
    %v250 = vpack.c.b16 %v236, %v235
    %v251 = vpack.c.b16 %v238, %v237
    %v252 = vpack.c.b16 %v240, %v239
    %v253 = vpack.c.b16 %v242, %v241
    %v254 = vpack.c.b16 %v244, %v243
    %v255 = vpack.c.b16 %v246, %v245
    %v256 = vpack.c.b16 %v248, %v247
    %265 = vmatprep.subr.bf16.mxu0 0
    %266 = vmatpush1.bf16.msra.mxu0 %v256
    %267 = vmatprep.subr.bf16.mxu0 0
    %268 = vmatpush1.bf16.msra.mxu0 %v255
    %269 = vmatprep.subr.bf16.mxu0 0
    %270 = vmatpush1.bf16.msra.mxu0 %v254
    %271 = vmatprep.subr.bf16.mxu0 0
    %272 = vmatpush1.bf16.msra.mxu0 %v253
    %273 = vmatprep.subr.bf16.mxu0 0
    %274 = vmatpush1.bf16.msra.mxu0 %v252
    %275 = vmatprep.subr.bf16.mxu0 0
    %276 = vmatpush1.bf16.msra.mxu0 %v251
    %277 = vmatprep.subr.bf16.mxu0 0
    %278 = vmatpush1.bf16.msra.mxu0 %v250
    %279 = vmatprep.subr.bf16.mxu0 0
    %280 = vmatpush1.bf16.msra.mxu0 %v249
    %281 = vmatprep.subr.bf16.mxu0 0
    %282 = vmatpush2.bf16.msra.mxu0 0
    %283 = vmatprep.subr.bf16.mxu0 0
    %284 = vmatpush2.bf16.msra.mxu0 0
    %285 = vmatprep.subr.bf16.mxu0 0
    %286 = vmatpush2.bf16.msra.mxu0 0
    %287 = vmatprep.subr.bf16.mxu0 0
    %288 = vmatpush2.bf16.msra.mxu0 0
    %289 = vmatprep.subr.bf16.mxu0 0
    %290 = vmatpush2.bf16.msra.mxu0 0
    %291 = vmatprep.subr.bf16.mxu0 0
    %292 = vmatpush2.bf16.msra.mxu0 0
    %293 = vmatprep.subr.bf16.mxu0 0
    %294 = vmatpush2.bf16.msra.mxu0 0
    %295 = vmatprep.subr.bf16.mxu0 0
    %296 = vmatpush2.bf16.msra.mxu0 0
    %297 = vmatprep.mubr.bf16.mxu0 0
    %298 = vmatmul.mubr.bf16.gmra.mxu0 %v193
    %v299 = vpop.f32.mrf.mxu0
    %v300 = vadd.f32 %v215, %v299
    %v301 = vpop.f32.mrf.mxu0
    %v302 = vpop.f32.mrf.mxu0
    %v303 = vpop.f32.mrf.mxu0
    %304 = vdwg.mxu0
    %305 = vst [vmem:[#allocation10] sm:$0xff] %v300
    // Predicated region
    $region42: #{tpu_custom_call.1} parent=1 // pred_check
      _
    $region43: #{tpu_custom_call.1} parent=1 // pred_check_branch
      %307 = sbr.rel (0) target = $region45
    $region44: #{tpu_custom_call.1} parent=1 // pred_region
      %s309 = ssub.s32 128, 128
      %310 = vsyncadd [#allocation4], %s309
      %s312 = sshll.u32 [#allocation10], 4
      %s313 = int_to_ptr.vmem [resolvable:$true] %s312
      %315 = dma.vmem_to_hbm [thread:$0]  %s313, 128, %s6, [#allocation4]
    $region45: #{tpu_custom_call.1} parent=1 // pred_fallthru
      _
    // Predicated region
    $region46: #{tpu_custom_call.1} parent=1 // pred_check
      _
    $region47: #{tpu_custom_call.1} parent=1 // pred_check_branch
      %317 = sbr.rel (0) target = $region49
    $region48: #{tpu_custom_call.1} parent=1 // pred_region
      %318 = dma.done [#allocation4], 128
    $region49: #{tpu_custom_call.1} parent=1 // pred_fallthru
      _
    %319 = vsyncpa [#allocation3], 1
    %320 = vsyncpa [#allocation6], 1
    %321 = vsyncpa [#allocation9], 1
    %322 = vsyncpa [#allocation4], 1

</llo_original>
